<compile_context>
chip_gen: v7x
topology: tpu7x:2x2x1
jax: 0.10.0
libtpu: 0.0.40
codegen_flags: <defaults>
</compile_context>

<pallas_src>
import jax
import jax.numpy as jnp
from jax import lax
from jax.experimental import pallas as pl
from jax.experimental.pallas import tpu as pltpu

INPUT_SIZE = 34
HIDDEN_SIZE = 100
OUTPUT_SIZE = 1
HIDDEN_PAD = 128  # hidden dim padded to a full lane width


def _round_up(n, m):
    return ((n + m - 1) // m) * m


def _mlp_kernel(x_ref, w1_ref, b1_ref, w23_ref, b23_ref, o_ref):
    # fc1 + ReLU:  (bt, 34) @ (34, 128) -> (bt, 128); padded columns stay 0.
    h1 = jnp.dot(x_ref[...], w1_ref[...], preferred_element_type=jnp.float32)
    h1 = jnp.maximum(h1 + b1_ref[...], 0.0)

    # Fused fc2∘fc3: contract the padded hidden/lane axis of h1 against the
    # (1, 128) fused weight row, producing the result directly in lane-dense
    # (1, bt) orientation (batch on the lane axis) -> unmasked stores.
    out_row = lax.dot_general(
        w23_ref[...], h1,
        dimension_numbers=(((1,), (1,)), ((), ())),
        preferred_element_type=jnp.float32,
    )  # (1, bt)
    o_ref[...] = (out_row + b23_ref[...]).astype(o_ref.dtype)


def _prepare_fused_params(params):
    """Fuse fc2∘fc3 and pad the hidden dim to 128 lanes (zeros are inert)."""
    w1, b1 = params["w1"], params["b1"]
    w2, b2 = params["w2"], params["b2"]
    w3, b3 = params["w3"], params["b3"]

    w23 = w2 @ w3            # (HIDDEN_SIZE, 1)
    b23 = b2 @ w3 + b3       # (1, 1)

    w1p = jnp.zeros((INPUT_SIZE, HIDDEN_PAD), jnp.float32).at[:, :HIDDEN_SIZE].set(w1)
    b1p = jnp.zeros((1, HIDDEN_PAD), jnp.float32).at[:, :HIDDEN_SIZE].set(b1)
    w23_row = jnp.zeros((1, HIDDEN_PAD), jnp.float32).at[:, :HIDDEN_SIZE].set(w23.T)
    return w1p, b1p, w23_row, b23


def simple_nn_forward(x, params, *, batch_tile=1024):
    """x: (B, INPUT_SIZE) float32 -> (B, OUTPUT_SIZE) float32."""
    assert batch_tile % 128 == 0, "batch_tile must be a multiple of 128"
    B = x.shape[0]

    w1p, b1p, w23_row, b23 = _prepare_fused_params(params)

    # Pad ragged batches up to a multiple of the tile (no-op when already
    # aligned); padded rows produce garbage that is sliced off afterwards.
    Bp = _round_up(max(B, 1), batch_tile)
    x_p = x if Bp == B else jnp.pad(x, ((0, Bp - B), (0, 0)))

    grid = (Bp // batch_tile,)

    out_row = pl.pallas_call(
        _mlp_kernel,
        out_shape=jax.ShapeDtypeStruct((1, Bp), jnp.float32),
        grid_spec=pltpu.PrefetchScalarGridSpec(
            num_scalar_prefetch=0,
            grid=grid,
            in_specs=[
                # activations tiled over batch; full (unpadded) feature extent
                pl.BlockSpec((batch_tile, INPUT_SIZE), lambda i: (i, 0)),
                # weights / biases: constant block index -> DMA'd once, resident
                pl.BlockSpec((INPUT_SIZE, HIDDEN_PAD), lambda i: (0, 0)),
                pl.BlockSpec((1, HIDDEN_PAD), lambda i: (0, 0)),
                pl.BlockSpec((1, HIDDEN_PAD), lambda i: (0, 0)),
                pl.BlockSpec((1, OUTPUT_SIZE), lambda i: (0, 0)),
            ],
            # lane-dense output: batch lives on the lane (last) axis
            out_specs=pl.BlockSpec((1, batch_tile), lambda i: (0, i)),
        ),
        compiler_params=pltpu.CompilerParams(
            dimension_semantics=("parallel",),
        ),
    )(x_p, w1p, b1p, w23_row, b23)

    # back to the PyTorch-style (B, 1) column
    return out_row[0, :B][:, None]


def init_params(key):
    """Deterministic parameter init matching PyTorch nn.Linear shapes.

    PyTorch stores weight as (out, in); we pre-transpose to (in, out) so the
    kernel computes x @ W + b directly (same math as x @ weight.T + bias).
    """
    k1, k2, k3, k4, k5, k6 = jax.random.split(key, 6)

    def uniform(k, shape, fan_in):
        bound = 1.0 / jnp.sqrt(fan_in)
        return jax.random.uniform(k, shape, jnp.float32, -bound, bound)

    return {
        "w1": uniform(k1, (INPUT_SIZE, HIDDEN_SIZE), INPUT_SIZE),
        "b1": uniform(k2, (1, HIDDEN_SIZE), INPUT_SIZE),
        "w2": uniform(k3, (HIDDEN_SIZE, HIDDEN_SIZE), HIDDEN_SIZE),
        "b2": uniform(k4, (1, HIDDEN_SIZE), HIDDEN_SIZE),
        "w3": uniform(k5, (HIDDEN_SIZE, OUTPUT_SIZE), HIDDEN_SIZE),
        "b3": uniform(k6, (1, OUTPUT_SIZE), HIDDEN_SIZE),
    }


def _reference_forward(x, p):
    # Unfused reference: exactly the PyTorch forward (ReLU only after fc1).
    h1 = jnp.maximum(x @ p["w1"] + p["b1"], 0.0)
    h2 = h1 @ p["w2"] + p["b2"]
    return h2 @ p["w3"] + p["b3"]


if __name__ == "__main__":
    key = jax.random.PRNGKey(0)
    pkey, xkey = jax.random.split(key)

    params = init_params(pkey)
    batch = 8  # small demo batch; wrapper pads to the batch tile
    x = jax.random.normal(xkey, (batch, INPUT_SIZE), dtype=jnp.float32)

    # small batch_tile for the demo (still a multiple of 128, 1 grid step);
    # production default is 1024.
    out = simple_nn_forward(x, params, batch_tile=128)
    out = jax.block_until_ready(out)

    ref = _reference_forward(x, params)
    assert out.shape == (batch, OUTPUT_SIZE)
    # fc2∘fc3 fusion reassociates f32 adds -> allow a slightly looser tolerance
    assert jnp.allclose(out, ref, atol=2e-4, rtol=2e-4), "mismatch vs JAX reference"

    print("KERNEL_OK")
</pallas_src>

<mosaic_0001>
module attributes {stable_mosaic.version = 11 : i64} {
  func.func @_mlp_kernel(%arg0: i32, %arg1: memref<128x34xf32, #tpu.memory_space<vmem>>, %arg2: memref<34x128xf32, #tpu.memory_space<vmem>>, %arg3: memref<1x128xf32, #tpu.memory_space<vmem>>, %arg4: memref<1x128xf32, #tpu.memory_space<vmem>>, %arg5: memref<1x1xf32, #tpu.memory_space<vmem>>, %arg6: memref<1x128xf32, #tpu.memory_space<vmem>>) attributes {dimension_semantics = [#tpu.dimension_semantics<parallel>], iteration_bounds = array<i64: 1>, scalar_prefetch = 0 : i64, scratch_operands = 0 : i64, tpu.core_type = #tpu.core_type<tc>, window_params = [{transform_indices = @transform_0, window_bounds = array<i64: 128, 34>}, {pipeline_mode = #tpu.pipeline_mode<synchronous>, transform_indices = @transform_1, window_bounds = array<i64: 34, 128>}, {pipeline_mode = #tpu.pipeline_mode<synchronous>, transform_indices = @transform_2, window_bounds = array<i64: 1, 128>}, {pipeline_mode = #tpu.pipeline_mode<synchronous>, transform_indices = @transform_3, window_bounds = array<i64: 1, 128>}, {pipeline_mode = #tpu.pipeline_mode<synchronous>, transform_indices = @transform_4, window_bounds = array<i64: 1, 1>}, {transform_indices = @transform_5, window_bounds = array<i64: 1, 128>}]} {
    %c0 = arith.constant 0 : index
    %c0_0 = arith.constant 0 : index
    %0 = vector.load %arg1[%c0, %c0_0] : memref<128x34xf32, #tpu.memory_space<vmem>>, vector<128x34xf32>
    %c0_1 = arith.constant 0 : index
    %c0_2 = arith.constant 0 : index
    %1 = vector.load %arg2[%c0_1, %c0_2] : memref<34x128xf32, #tpu.memory_space<vmem>>, vector<34x128xf32>
    %cst = arith.constant dense<0.000000e+00> : vector<128x128xf32>
    %2 = tpu.matmul %0, %1, %cst {dimension_numbers = #tpu.dot_dimension_numbers<[1], [0], [0], [1], [0, 0, 1, 1], [], []>} : vector<128x34xf32>, vector<34x128xf32>, vector<128x128xf32> -> vector<128x128xf32>
    %c0_3 = arith.constant 0 : index
    %c0_4 = arith.constant 0 : index
    %3 = vector.load %arg3[%c0_3, %c0_4] : memref<1x128xf32, #tpu.memory_space<vmem>>, vector<1x128xf32>
    %4 = vector.broadcast %3 : vector<1x128xf32> to vector<128x128xf32>
    %5 = arith.addf %2, %4 : vector<128x128xf32>
    %cst_5 = arith.constant 0.000000e+00 : f32
    %6 = vector.broadcast %cst_5 : f32 to vector<128x128xf32>
    %7 = arith.maximumf %5, %6 : vector<128x128xf32>
    %c0_6 = arith.constant 0 : index
    %c0_7 = arith.constant 0 : index
    %8 = vector.load %arg4[%c0_6, %c0_7] : memref<1x128xf32, #tpu.memory_space<vmem>>, vector<1x128xf32>
    %cst_8 = arith.constant dense<0.000000e+00> : vector<1x128xf32>
    %9 = tpu.matmul %8, %7, %cst_8 {dimension_numbers = #tpu.dot_dimension_numbers<[1], [1], [0], [0], [0, 0, 1, 0], [], []>} : vector<1x128xf32>, vector<128x128xf32>, vector<1x128xf32> -> vector<1x128xf32>
    %c0_9 = arith.constant 0 : index
    %c0_10 = arith.constant 0 : index
    %10 = vector.load %arg5[%c0_9, %c0_10] : memref<1x1xf32, #tpu.memory_space<vmem>>, vector<1x1xf32>
    %11 = vector.broadcast %10 : vector<1x1xf32> to vector<1x128xf32>
    %12 = arith.addf %9, %11 : vector<1x128xf32>
    %c0_11 = arith.constant 0 : index
    %c0_12 = arith.constant 0 : index
    %13 = vector.load %arg6[%c0_11, %c0_12] : memref<1x128xf32, #tpu.memory_space<vmem>>, vector<1x128xf32>
    tpu.vector_store %arg6[%c0_11, %c0_12], %12 {strides = array<i32>} : memref<1x128xf32, #tpu.memory_space<vmem>>, vector<1x128xf32>,
    return
  }
  func.func @transform_0(%arg0: i32) -> (i32, i32) {
    %c0_i32 = arith.constant 0 : i32
    %c0_i32_0 = arith.constant 0 : i32
    return %arg0, %c0_i32 : i32, i32
  }
  func.func @transform_1(%arg0: i32) -> (i32, i32) {
    %c0_i32 = arith.constant 0 : i32
    %c0_i32_0 = arith.constant 0 : i32
    %c0_i32_1 = arith.constant 0 : i32
    return %c0_i32, %c0_i32_0 : i32, i32
  }
  func.func @transform_2(%arg0: i32) -> (i32, i32) {
    %c0_i32 = arith.constant 0 : i32
    %c0_i32_0 = arith.constant 0 : i32
    %c0_i32_1 = arith.constant 0 : i32
    return %c0_i32, %c0_i32_0 : i32, i32
  }
  func.func @transform_3(%arg0: i32) -> (i32, i32) {
    %c0_i32 = arith.constant 0 : i32
    %c0_i32_0 = arith.constant 0 : i32
    %c0_i32_1 = arith.constant 0 : i32
    return %c0_i32, %c0_i32_0 : i32, i32
  }
  func.func @transform_4(%arg0: i32) -> (i32, i32) {
    %c0_i32 = arith.constant 0 : i32
    %c0_i32_0 = arith.constant 0 : i32
    %c0_i32_1 = arith.constant 0 : i32
    return %c0_i32, %c0_i32_0 : i32, i32
  }
  func.func @transform_5(%arg0: i32) -> (i32, i32) {
    %c0_i32 = arith.constant 0 : i32
    %c0_i32_0 = arith.constant 0 : i32
    return %c0_i32, %arg0 : i32, i32
  }
}

</mosaic_0001>

<llo_original>
// kernel: tpu_custom_call.1
$region0: #{tpu_custom_call.1}
  #allocation0 [shape = 'u32[]', space=smem, size = 0x4, offset = 0x4, fixed_abs, tag = 'smem constant byte address 0x4 - core index']
  #allocation1 [shape = 'u32[144,128]{1,0:T(1,128)}', space=vmem, size = 0x12000, scoped, tag = 'internal scratch']
  #allocation2 [shape = 'f32[1,1]{1,0:T(1,128)S(1)}', space=vmem, size = 0x200, scoped, tag = 'scoped memory for tpu_custom_call.1']
  %s0 = inlined_call_operand.vmem [shape: f32[128,34], index: 0, kind: input, shape index: {}]
  %s1 = inlined_call_operand.vmem [shape: f32[34,128], index: 1, kind: input, shape index: {}]
  %s2 = inlined_call_operand.vmem [shape: f32[1,128], index: 2, kind: input, shape index: {}]
  %s3 = inlined_call_operand.vmem [shape: f32[1,128], index: 3, kind: input, shape index: {}]
  %s4 = inlined_call_operand.<no memory space> [shape: f32[1,1], index: 4, kind: input, shape index: {}]
  %s5 = inlined_call_operand.hbm [shape: f32[1,128], index: 5, kind: output, shape index: {}]
  %s6 = sld [smem:[#allocation0]]
  $region30: #{tpu_custom_call.1} parent=0
    _
  %s8 = ssub.s32 1, %s6
  %s9 = scalar_select 0, %s8, %s6
  %v10 = vstv %s4
  %11 = vst [vmem:[#allocation2] sm:$0x1] %v10
  $region1: #{tpu_custom_call.1} parent=0
    #allocation3 [shape = 'u8[512]{0}', space=vmem, size = 0x400, scoped, tag = 'output window, operand 0, single buffered']
    #allocation4 [shape = 's32[1]{0}', space=sflag, size = 0x4, scoped, tag = 'scoped memory for tpu_custom_call.1']
    %12 = vsyncpa [#allocation4], 0
    // Predicated region
    $region2: #{tpu_custom_call.1} parent=1 // pred_check
      _
    $region3: #{tpu_custom_call.1} parent=1 // pred_check_branch
      %14 = sbr.rel (0) target = $region5
    $region4: #{tpu_custom_call.1} parent=1 // pred_region
      _
    $region5: #{tpu_custom_call.1} parent=1 // pred_fallthru
      _
    // Predicated region
    $region6: #{tpu_custom_call.1} parent=1 // pred_check
      _
    $region7: #{tpu_custom_call.1} parent=1 // pred_check_branch
      %16 = sbr.rel (0) target = $region9
    $region8: #{tpu_custom_call.1} parent=1 // pred_region
      _
    $region9: #{tpu_custom_call.1} parent=1 // pred_fallthru
      _
    // Predicated region
    $region10: #{tpu_custom_call.1} parent=1 // pred_check
      _
    $region11: #{tpu_custom_call.1} parent=1 // pred_check_branch
      %18 = sbr.rel (0) target = $region13
    $region12: #{tpu_custom_call.1} parent=1 // pred_region
      _
    $region13: #{tpu_custom_call.1} parent=1 // pred_fallthru
      _
    // Predicated region
    $region14: #{tpu_custom_call.1} parent=1 // pred_check
      _
    $region15: #{tpu_custom_call.1} parent=1 // pred_check_branch
      %20 = sbr.rel (0) target = $region17
    $region16: #{tpu_custom_call.1} parent=1 // pred_region
      _
    $region17: #{tpu_custom_call.1} parent=1 // pred_fallthru
      _
    // Predicated region
    $region18: #{tpu_custom_call.1} parent=1 // pred_check
      _
    $region19: #{tpu_custom_call.1} parent=1 // pred_check_branch
      %22 = sbr.rel (0) target = $region21
    $region20: #{tpu_custom_call.1} parent=1 // pred_region
      _
    $region21: #{tpu_custom_call.1} parent=1 // pred_fallthru
      _
    %v23 = vld [vmem:[%s0] sm:$0xff]
    %v24 = vld [vmem:[%s0 + $0x8] sm:$0xff]
    %v25 = vld [vmem:[%s0 + $0x10] sm:$0xff]
    %v26 = vld [vmem:[%s0 + $0x18] sm:$0xff]
    %v27 = vld [vmem:[%s0 + $0x20] sm:$0xff]
    %v28 = vld [vmem:[%s0 + $0x28] sm:$0xff]
    %v29 = vld [vmem:[%s0 + $0x30] sm:$0xff]
    %v30 = vld [vmem:[%s0 + $0x38] sm:$0xff]
    %v31 = vld [vmem:[%s0 + $0x40] sm:$0xff]
    %v32 = vld [vmem:[%s0 + $0x48] sm:$0xff]
    %v33 = vld [vmem:[%s0 + $0x50] sm:$0xff]
    %v34 = vld [vmem:[%s0 + $0x58] sm:$0xff]
    %v35 = vld [vmem:[%s0 + $0x60] sm:$0xff]
    %v36 = vld [vmem:[%s0 + $0x68] sm:$0xff]
    %v37 = vld [vmem:[%s0 + $0x70] sm:$0xff]
    %v38 = vld [vmem:[%s0 + $0x78] sm:$0xff]
    %v39 = vld [vmem:[%s1] sm:$0xff]
    %v40 = vld [vmem:[%s1 + $0x8] sm:$0xff]
    %v41 = vld [vmem:[%s1 + $0x10] sm:$0xff]
    %v42 = vld [vmem:[%s1 + $0x18] sm:$0xff]
    %v43 = vld [vmem:[%s1 + $0x20] sm:$0x3]
    %v44 = vld [vmem:[%s2] sm:$0x1]
    %v46 = vlaneseq
    %v47 = vshrl.u32 %v46, 7
    %v48 = vsub.s32 0, %v47
    %v49 = vrot.slane %v44, %v48
    %vm51 = vcmask 277504
    %v53 = vsel %vm51, %v23, 0
    %v56 = vsel %vm51, %v24, 0
    %v59 = vsel %vm51, %v25, 0
    %v62 = vsel %vm51, %v26, 0
    %v65 = vsel %vm51, %v27, 0
    %v68 = vsel %vm51, %v28, 0
    %v71 = vsel %vm51, %v29, 0
    %v74 = vsel %vm51, %v30, 0
    %v77 = vsel %vm51, %v31, 0
    %v80 = vsel %vm51, %v32, 0
    %v83 = vsel %vm51, %v33, 0
    %v86 = vsel %vm51, %v34, 0
    %v89 = vsel %vm51, %v35, 0
    %v92 = vsel %vm51, %v36, 0
    %v95 = vsel %vm51, %v37, 0
    %v98 = vsel %vm51, %v38, 0
    %vm100 = vcmask 1041408
    %v102 = vsel %vm100, %v43, 0
    %104 = vmatprep.subr.mxu0 0.0
    %105 = vmatpush1.msra.mxu0 %v39
    %106 = vmatprep.subr.mxu0 0.0
    %107 = vmatpush1.msra.mxu0 %v40
    %108 = vmatprep.subr.mxu0 0.0
    %109 = vmatpush1.msra.mxu0 %v41
    %110 = vmatprep.subr.mxu0 0.0
    %111 = vmatpush1.msra.mxu0 %v42
    %112 = vmatprep.subr.mxu0 0.0
    %113 = vmatpush1.msra.mxu0 %v102
    %114 = vmatprep.subr.mxu0 0.0
    %115 = vmatpush1.msra.mxu0 0.0
    %116 = vmatprep.subr.mxu0 0.0
    %117 = vmatpush1.msra.mxu0 0.0
    %118 = vmatprep.subr.mxu0 0.0
    %119 = vmatpush1.msra.mxu0 0.0
    %120 = vmatprep.subr.mxu0 0.0
    %121 = vmatpush1.msra.mxu0 0.0
    %122 = vmatprep.subr.mxu0 0.0
    %123 = vmatpush1.msra.mxu0 0.0
    %124 = vmatprep.subr.mxu0 0.0
    %125 = vmatpush1.msra.mxu0 0.0
    %126 = vmatprep.subr.mxu0 0.0
    %127 = vmatpush1.msra.mxu0 0.0
    %128 = vmatprep.subr.mxu0 0.0
    %129 = vmatpush1.msra.mxu0 0.0
    %130 = vmatprep.subr.mxu0 0.0
    %131 = vmatpush1.msra.mxu0 0.0
    %132 = vmatprep.subr.mxu0 0.0
    %133 = vmatpush1.msra.mxu0 0.0
    %134 = vmatprep.subr.mxu0 0.0
    %135 = vmatpush1.msra.mxu0 0.0
    %136 = vmatprep.subr.mxu0 0.0
    %137 = vmatpush1.msra.mxu0 0.0
    %138 = vmatprep.subr.mxu0 0.0
    %139 = vmatpush1.msra.mxu0 0.0
    %140 = vmatprep.subr.mxu0 0.0
    %141 = vmatpush1.msra.mxu0 0.0
    %142 = vmatprep.subr.mxu0 0.0
    %143 = vmatpush1.msra.mxu0 0.0
    %144 = vmatprep.subr.mxu0 0.0
    %145 = vmatpush1.msra.mxu0 0.0
    %146 = vmatprep.subr.mxu0 0.0
    %147 = vmatpush1.msra.mxu0 0.0
    %148 = vmatprep.subr.mxu0 0.0
    %149 = vmatpush1.msra.mxu0 0.0
    %150 = vmatprep.subr.mxu0 0.0
    %151 = vmatpush1.msra.mxu0 0.0
    %152 = vmatprep.subr.mxu0 0.0
    %153 = vmatpush1.msra.mxu0 0.0
    %154 = vmatprep.subr.mxu0 0.0
    %155 = vmatpush1.msra.mxu0 0.0
    %156 = vmatprep.subr.mxu0 0.0
    %157 = vmatpush1.msra.mxu0 0.0
    %158 = vmatprep.subr.mxu0 0.0
    %159 = vmatpush1.msra.mxu0 0.0
    %160 = vmatprep.subr.mxu0 0.0
    %161 = vmatpush1.msra.mxu0 0.0
    %162 = vmatprep.subr.mxu0 0.0
    %163 = vmatpush1.msra.mxu0 0.0
    %164 = vmatprep.subr.mxu0 0.0
    %165 = vmatpush1.msra.mxu0 0.0
    %166 = vmatprep.subr.mxu0 0.0
    %167 = vmatpush1.msra.mxu0 0.0
    %168 = vmatprep.mubr.f32.mxu0 0.0
    %169 = vmatmul.mubr.f32.gmra.mrb[0].mxu0 %v53
    %v170 = vpop.f32.mrb[0].mxu0
    %v171 = vadd.f32 %v49, %v170
    %v172 = vpop.f32.mrb[0].mxu0
    %173 = vmatprep.mubr.f32.mxu0 0.0
    %174 = vmatmul.mubr.f32.gmra.mrb[0].mxu0 %v56
    %v175 = vpop.f32.mrb[0].mxu0
    %v176 = vadd.f32 %v49, %v175
    %v177 = vpop.f32.mrb[0].mxu0
    %178 = vmatprep.mubr.f32.mxu0 0.0
    %179 = vmatmul.mubr.f32.gmra.mrb[0].mxu0 %v59
    %v180 = vpop.f32.mrb[0].mxu0
    %v181 = vadd.f32 %v49, %v180
    %v182 = vpop.f32.mrb[0].mxu0
    %183 = vmatprep.mubr.f32.mxu0 0.0
    %184 = vmatmul.mubr.f32.gmra.mrb[0].mxu0 %v62
    %v185 = vpop.f32.mrb[0].mxu0
    %v186 = vadd.f32 %v49, %v185
    %v187 = vpop.f32.mrb[0].mxu0
    %188 = vmatprep.mubr.f32.mxu0 0.0
    %189 = vmatmul.mubr.f32.gmra.mrb[0].mxu0 %v65
    %v190 = vpop.f32.mrb[0].mxu0
    %v191 = vadd.f32 %v49, %v190
    %v192 = vpop.f32.mrb[0].mxu0
    %193 = vmatprep.mubr.f32.mxu0 0.0
    %194 = vmatmul.mubr.f32.gmra.mrb[0].mxu0 %v68
    %v195 = vpop.f32.mrb[0].mxu0
    %v196 = vadd.f32 %v49, %v195
    %v197 = vpop.f32.mrb[0].mxu0
    %198 = vmatprep.mubr.f32.mxu0 0.0
    %199 = vmatmul.mubr.f32.gmra.mrb[0].mxu0 %v71
    %v200 = vpop.f32.mrb[0].mxu0
    %v201 = vadd.f32 %v49, %v200
    %v202 = vpop.f32.mrb[0].mxu0
    %203 = vmatprep.mubr.f32.mxu0 0.0
    %204 = vmatmul.mubr.f32.gmra.mrb[0].mxu0 %v74
    %v205 = vpop.f32.mrb[0].mxu0
    %v206 = vadd.f32 %v49, %v205
    %v207 = vpop.f32.mrb[0].mxu0
    %208 = vmatprep.mubr.f32.mxu0 0.0
    %209 = vmatmul.mubr.f32.gmra.mrb[0].mxu0 %v77
    %v210 = vpop.f32.mrb[0].mxu0
    %v211 = vadd.f32 %v49, %v210
    %v212 = vpop.f32.mrb[0].mxu0
    %213 = vmatprep.mubr.f32.mxu0 0.0
    %214 = vmatmul.mubr.f32.gmra.mrb[0].mxu0 %v80
    %v215 = vpop.f32.mrb[0].mxu0
    %v216 = vadd.f32 %v49, %v215
    %v217 = vpop.f32.mrb[0].mxu0
    %218 = vmatprep.mubr.f32.mxu0 0.0
    %219 = vmatmul.mubr.f32.gmra.mrb[0].mxu0 %v83
    %v220 = vpop.f32.mrb[0].mxu0
    %v221 = vadd.f32 %v49, %v220
    %v222 = vpop.f32.mrb[0].mxu0
    %223 = vmatprep.mubr.f32.mxu0 0.0
    %224 = vmatmul.mubr.f32.gmra.mrb[0].mxu0 %v86
    %v225 = vpop.f32.mrb[0].mxu0
    %v226 = vadd.f32 %v49, %v225
    %v227 = vpop.f32.mrb[0].mxu0
    %228 = vmatprep.mubr.f32.mxu0 0.0
    %229 = vmatmul.mubr.f32.gmra.mrb[0].mxu0 %v89
    %v230 = vpop.f32.mrb[0].mxu0
    %v231 = vadd.f32 %v49, %v230
    %v232 = vpop.f32.mrb[0].mxu0
    %233 = vmatprep.mubr.f32.mxu0 0.0
    %234 = vmatmul.mubr.f32.gmra.mrb[0].mxu0 %v92
    %v235 = vpop.f32.mrb[0].mxu0
    %v236 = vadd.f32 %v49, %v235
    %v237 = vpop.f32.mrb[0].mxu0
    %238 = vmatprep.mubr.f32.mxu0 0.0
    %239 = vmatmul.mubr.f32.gmra.mrb[0].mxu0 %v95
    %v240 = vpop.f32.mrb[0].mxu0
    %v241 = vadd.f32 %v49, %v240
    %v242 = vpop.f32.mrb[0].mxu0
    %243 = vmatprep.mubr.f32.mxu0 0.0
    %244 = vmatmul.mubr.f32.gmra.mrb[0].mxu0 %v98
    %v245 = vpop.f32.mrb[0].mxu0
    %v246 = vadd.f32 %v49, %v245
    %v247 = vpop.f32.mrb[0].mxu0
    %248 = vdwg.mxu0
    %v249 = vmax.f32 %v171, 0.0
    %v250 = vmax.f32 %v176, 0.0
    %v251 = vmax.f32 %v181, 0.0
    %v252 = vmax.f32 %v186, 0.0
    %v253 = vmax.f32 %v191, 0.0
    %v254 = vmax.f32 %v196, 0.0
    %v255 = vmax.f32 %v201, 0.0
    %v256 = vmax.f32 %v206, 0.0
    %v257 = vmax.f32 %v211, 0.0
    %v258 = vmax.f32 %v216, 0.0
    %v259 = vmax.f32 %v221, 0.0
    %v260 = vmax.f32 %v226, 0.0
    %v261 = vmax.f32 %v231, 0.0
    %v262 = vmax.f32 %v236, 0.0
    %v263 = vmax.f32 %v241, 0.0
    %v264 = vmax.f32 %v246, 0.0
    %v265 = vld [vmem:[%s3] sm:$0x1]
    %v266 = vld [vmem:[#allocation2] sm:$0x1]
    %268 = vset.pattern.permute.xlu0 0
    %269 = vperm.xlu0 %268, %v266
    %v270 = vpop.permute.xlu0 %269
    %v272 = vlaneseq
    %v273 = vshrl.u32 %v272, 7
    %v274 = vsub.s32 0, %v273
    %v275 = vrot.slane %v270, %v274
    %276 = vmatprep.subr.mxu0 0.0
    %277 = vmatpush1.xpose.msra.mxu0 %v249
    %278 = vmatprep.subr.mxu0 0.0
    %279 = vmatpush1.xpose.msra.mxu0 %v250
    %280 = vmatprep.subr.mxu0 0.0
    %281 = vmatpush1.xpose.msra.mxu0 %v251
    %282 = vmatprep.subr.mxu0 0.0
    %283 = vmatpush1.xpose.msra.mxu0 %v252
    %284 = vmatprep.subr.mxu0 0.0
    %285 = vmatpush1.xpose.msra.mxu0 %v253
    %286 = vmatprep.subr.mxu0 0.0
    %287 = vmatpush1.xpose.msra.mxu0 %v254
    %288 = vmatprep.subr.mxu0 0.0
    %289 = vmatpush1.xpose.msra.mxu0 %v255
    %290 = vmatprep.subr.mxu0 0.0
    %291 = vmatpush1.xpose.msra.mxu0 %v256
    %292 = vmatprep.subr.mxu0 0.0
    %293 = vmatpush1.xpose.msra.mxu0 %v257
    %294 = vmatprep.subr.mxu0 0.0
    %295 = vmatpush1.xpose.msra.mxu0 %v258
    %296 = vmatprep.subr.mxu0 0.0
    %297 = vmatpush1.xpose.msra.mxu0 %v259
    %298 = vmatprep.subr.mxu0 0.0
    %299 = vmatpush1.xpose.msra.mxu0 %v260
    %300 = vmatprep.subr.mxu0 0.0
    %301 = vmatpush1.xpose.msra.mxu0 %v261
    %302 = vmatprep.subr.mxu0 0.0
    %303 = vmatpush1.xpose.msra.mxu0 %v262
    %304 = vmatprep.subr.mxu0 0.0
    %305 = vmatpush1.xpose.msra.mxu0 %v263
    %306 = vmatprep.subr.mxu0 0.0
    %307 = vmatpush1.xpose.msra.mxu0 %v264
    %308 = vmatprep.subr.mxu0 0.0
    %309 = vmatpush1.xpose.msra.mxu0 0.0
    %310 = vmatprep.subr.mxu0 0.0
    %311 = vmatpush1.xpose.msra.mxu0 0.0
    %312 = vmatprep.subr.mxu0 0.0
    %313 = vmatpush1.xpose.msra.mxu0 0.0
    %314 = vmatprep.subr.mxu0 0.0
    %315 = vmatpush1.xpose.msra.mxu0 0.0
    %316 = vmatprep.subr.mxu0 0.0
    %317 = vmatpush1.xpose.msra.mxu0 0.0
    %318 = vmatprep.subr.mxu0 0.0
    %319 = vmatpush1.xpose.msra.mxu0 0.0
    %320 = vmatprep.subr.mxu0 0.0
    %321 = vmatpush1.xpose.msra.mxu0 0.0
    %322 = vmatprep.subr.mxu0 0.0
    %323 = vmatpush1.xpose.msra.mxu0 0.0
    %324 = vmatprep.subr.mxu0 0.0
    %325 = vmatpush1.xpose.msra.mxu0 0.0
    %326 = vmatprep.subr.mxu0 0.0
    %327 = vmatpush1.xpose.msra.mxu0 0.0
    %328 = vmatprep.subr.mxu0 0.0
    %329 = vmatpush1.xpose.msra.mxu0 0.0
    %330 = vmatprep.subr.mxu0 0.0
    %331 = vmatpush1.xpose.msra.mxu0 0.0
    %332 = vmatprep.subr.mxu0 0.0
    %333 = vmatpush1.xpose.msra.mxu0 0.0
    %334 = vmatprep.subr.mxu0 0.0
    %335 = vmatpush1.xpose.msra.mxu0 0.0
    %336 = vmatprep.subr.mxu0 0.0
    %337 = vmatpush1.xpose.msra.mxu0 0.0
    %338 = vmatprep.subr.mxu0 0.0
    %339 = vmatpush1.xpose.msra.mxu0 0.0
    %340 = vmatprep.mubr.f32.mxu0 0.0
    %341 = vmatmul.mubr.f32.gmra.mrb[0].mxu0 %v265
    %v342 = vpop.f32.mrb[0].mxu0
    %v343 = vadd.f32 %v275, %v342
    %v344 = vpop.f32.mrb[0].mxu0
    %345 = vdwg.mxu0
    %346 = vst [vmem:[#allocation3] sm:$0x1] %v343
    // Predicated region
    $region22: #{tpu_custom_call.1} parent=1 // pred_check
      _
    $region23: #{tpu_custom_call.1} parent=1 // pred_check_branch
      %348 = sbr.rel (0) target = $region25
    $region24: #{tpu_custom_call.1} parent=1 // pred_region
      %s350 = ssub.s32 16, 16
      %351 = vsyncadd [#allocation4], %s350
      %s353 = sshll.u32 [#allocation3], 4
      %s354 = int_to_ptr.vmem [resolvable:$true] %s353
      %356 = dma.vmem_to_hbm [thread:$0]  %s354, 16, %s5, [#allocation4]
    $region25: #{tpu_custom_call.1} parent=1 // pred_fallthru
      _
    // Predicated region
    $region26: #{tpu_custom_call.1} parent=1 // pred_check
      _
    $region27: #{tpu_custom_call.1} parent=1 // pred_check_branch
      %358 = sbr.rel (0) target = $region29
    $region28: #{tpu_custom_call.1} parent=1 // pred_region
      %359 = dma.done [#allocation4], 16
    $region29: #{tpu_custom_call.1} parent=1 // pred_fallthru
      _
    %360 = vsyncpa [#allocation4], 1

</llo_original>
